<compile_context>
chip_gen: v7x
topology: tpu7x:2x2x1
jax: 0.10.0
libtpu: 0.0.40
codegen_flags: <defaults>
</compile_context>

<pallas_src>
import functools

import jax
import jax.numpy as jnp
from jax.experimental import pallas as pl
from jax.experimental.pallas import tpu as pltpu


def _round_up(x, m):
    return ((x + m - 1) // m) * m


def _mlp_kernel(x_ref, *refs, alpha, n_layers):
    """Fused MLP body: refs = (w0, b0, w1, b1, ..., w_{n-1}, b_{n-1}, o_ref)."""
    o_ref = refs[-1]
    wb = refs[:-1]
    # f32 input block -> bf16 operand for the MXU (accumulation stays f32).
    h = x_ref[...].astype(jnp.bfloat16)
    for i in range(n_layers):
        w = wb[2 * i][...]        # bf16 (in, out), resident in VMEM across steps
        b = wb[2 * i + 1][...]    # f32  (1, out)
        y = jnp.dot(h, w, preferred_element_type=jnp.float32) + b
        if i < n_layers - 1:
            y = jnp.where(y >= 0, y, alpha * y)   # LeakyReLU
            h = y.astype(jnp.bfloat16)            # bf16 operand for next dot
        else:
            h = y                                 # final layer: no activation
    o_ref[...] = h.astype(o_ref.dtype)


def init_mlp_params(key, num_inputs, hidden_layers, num_outputs):
    """PyTorch nn.Linear-style init. Weight stored as (in, out) = Linear.weight.T, bias (1, out)."""
    dims = [num_inputs] + list(hidden_layers) + [num_outputs]
    params = []
    for i in range(len(dims) - 1):
        fan_in, fan_out = dims[i], dims[i + 1]
        key, kw, kb = jax.random.split(key, 3)
        bound = 1.0 / (fan_in ** 0.5)
        w = jax.random.uniform(kw, (fan_in, fan_out), jnp.float32, -bound, bound)
        b = jax.random.uniform(kb, (1, fan_out), jnp.float32, -bound, bound)
        params.append((w, b))
    return params


def prepare_params(params):
    """One-time prep, hoisted out of the per-call forward path: bf16 weights, f32 (1,out) biases.

    No padding: weight/bias blocks use their full array shapes (exempt from the
    (8,128) divisibility rule), so zero HBM bytes are wasted on padding columns.
    """
    return [
        (w.astype(jnp.bfloat16), b.reshape(1, -1).astype(jnp.float32))
        for (w, b) in params
    ]


def _pick_batch_tile(batch, block_batch):
    """Batch tile: big (default up to 1024 rows) to amortize per-step overhead, but
    split into >= 2 grid steps when possible so v7x's two TensorCores both get work."""
    if batch >= 2 * block_batch:
        return block_batch
    if batch >= 32:
        return min(block_batch, _round_up(pl.cdiv(batch, 2), 16))
    return _round_up(batch, 8)


def mlp_forward(x, prepared_params, alpha, *, block_batch=1024):
    """Equivalent of Model.forward: hidden layers with LeakyReLU, final layer linear."""
    batch, num_inputs = x.shape
    n_layers = len(prepared_params)
    num_outputs = prepared_params[-1][0].shape[1]

    tb = _pick_batch_tile(batch, block_batch)
    grid = (pl.cdiv(batch, tb),)

    # x streams through the grid; weights/biases use constant index_maps so they are
    # DMA'd once and stay resident in VMEM across grid steps.
    in_specs = [pl.BlockSpec((tb, num_inputs), lambda i: (i, 0))]
    flat_params = []
    for (w, b) in prepared_params:
        in_specs.append(pl.BlockSpec(w.shape, lambda i: (0, 0)))
        in_specs.append(pl.BlockSpec(b.shape, lambda i: (0, 0)))
        flat_params.extend([w, b])

    kernel = functools.partial(_mlp_kernel, alpha=alpha, n_layers=n_layers)

    return pl.pallas_call(
        kernel,
        out_shape=jax.ShapeDtypeStruct((batch, num_outputs), jnp.float32),
        grid=grid,
        in_specs=in_specs,
        out_specs=pl.BlockSpec((tb, num_outputs), lambda i: (i, 0)),
        compiler_params=pltpu.CompilerParams(
            dimension_semantics=("parallel",),
        ),
    )(x, *flat_params)


def _reference(x, params, alpha):
    h = x
    for i, (w, b) in enumerate(params):
        h = h @ w + b
        if i < len(params) - 1:
            h = jnp.where(h >= 0, h, alpha * h)
    return h


if __name__ == "__main__":
    # Model(num_inputs=32, hidden_layers=[64, 48], num_outputs=10, alpha=0.01)
    num_inputs = 32
    hidden_layers = [64, 48]
    num_outputs = 10
    alpha = 0.01

    key = jax.random.PRNGKey(0)
    key, kx = jax.random.split(key)
    params = init_mlp_params(key, num_inputs, hidden_layers, num_outputs)
    prepared = prepare_params(params)  # done once, outside the forward path

    # Case 1: tiny batch, single grid step.
    batch1 = 8
    x1 = jax.random.normal(kx, (batch1, num_inputs), jnp.float32)
    out1 = jax.block_until_ready(mlp_forward(x1, prepared, alpha))
    ref1 = _reference(x1, params, alpha)
    assert out1.shape == (batch1, num_outputs)
    # bf16 MXU operands -> ~1e-2-level parity vs the f32 reference.
    assert jnp.allclose(out1, ref1, atol=5e-2, rtol=5e-2), float(jnp.max(jnp.abs(out1 - ref1)))

    # Case 2: exercise a multi-step "parallel" batch grid with a small tile.
    key, kx2 = jax.random.split(key)
    batch2 = 64
    x2 = jax.random.normal(kx2, (batch2, num_inputs), jnp.float32)
    out2 = jax.block_until_ready(mlp_forward(x2, prepared, alpha, block_batch=16))
    ref2 = _reference(x2, params, alpha)
    assert out2.shape == (batch2, num_outputs)
    assert jnp.allclose(out2, ref2, atol=5e-2, rtol=5e-2), float(jnp.max(jnp.abs(out2 - ref2)))

    # Case 3: batch not a multiple of the tile (partial trailing block handled by Pallas).
    key, kx3 = jax.random.split(key)
    batch3 = 100
    x3 = jax.random.normal(kx3, (batch3, num_inputs), jnp.float32)
    out3 = jax.block_until_ready(mlp_forward(x3, prepared, alpha))
    ref3 = _reference(x3, params, alpha)
    assert out3.shape == (batch3, num_outputs)
    assert jnp.allclose(out3, ref3, atol=5e-2, rtol=5e-2), float(jnp.max(jnp.abs(out3 - ref3)))

    print("KERNEL_OK")
</pallas_src>

<mosaic_0001>
module attributes {stable_mosaic.version = 11 : i64} {
  func.func @_mlp_kernel(%arg0: i32, %arg1: memref<8x32xf32, #tpu.memory_space<vmem>>, %arg2: memref<32x64xbf16, #tpu.memory_space<vmem>>, %arg3: memref<1x64xf32, #tpu.memory_space<vmem>>, %arg4: memref<64x48xbf16, #tpu.memory_space<vmem>>, %arg5: memref<1x48xf32, #tpu.memory_space<vmem>>, %arg6: memref<48x10xbf16, #tpu.memory_space<vmem>>, %arg7: memref<1x10xf32, #tpu.memory_space<vmem>>, %arg8: memref<8x10xf32, #tpu.memory_space<vmem>>) attributes {dimension_semantics = [#tpu.dimension_semantics<parallel>], iteration_bounds = array<i64: 1>, scalar_prefetch = 0 : i64, scratch_operands = 0 : i64, tpu.core_type = #tpu.core_type<tc>, window_params = [{transform_indices = @transform_0, window_bounds = array<i64: 8, 32>}, {pipeline_mode = #tpu.pipeline_mode<synchronous>, transform_indices = @transform_1, window_bounds = array<i64: 32, 64>}, {pipeline_mode = #tpu.pipeline_mode<synchronous>, transform_indices = @transform_2, window_bounds = array<i64: 1, 64>}, {pipeline_mode = #tpu.pipeline_mode<synchronous>, transform_indices = @transform_3, window_bounds = array<i64: 64, 48>}, {pipeline_mode = #tpu.pipeline_mode<synchronous>, transform_indices = @transform_4, window_bounds = array<i64: 1, 48>}, {pipeline_mode = #tpu.pipeline_mode<synchronous>, transform_indices = @transform_5, window_bounds = array<i64: 48, 10>}, {pipeline_mode = #tpu.pipeline_mode<synchronous>, transform_indices = @transform_6, window_bounds = array<i64: 1, 10>}, {transform_indices = @transform_7, window_bounds = array<i64: 8, 10>}]} {
    %c0 = arith.constant 0 : index
    %c0_0 = arith.constant 0 : index
    %0 = vector.load %arg1[%c0, %c0_0] : memref<8x32xf32, #tpu.memory_space<vmem>>, vector<8x32xf32>
    %1 = arith.truncf %0 : vector<8x32xf32> to vector<8x32xbf16>
    %c0_1 = arith.constant 0 : index
    %c0_2 = arith.constant 0 : index
    %2 = vector.load %arg2[%c0_1, %c0_2] : memref<32x64xbf16, #tpu.memory_space<vmem>>, vector<32x64xbf16>
    %c0_3 = arith.constant 0 : index
    %c0_4 = arith.constant 0 : index
    %3 = vector.load %arg3[%c0_3, %c0_4] : memref<1x64xf32, #tpu.memory_space<vmem>>, vector<1x64xf32>
    %cst = arith.constant dense<0.000000e+00> : vector<8x64xf32>
    %4 = tpu.matmul %1, %2, %cst {dimension_numbers = #tpu.dot_dimension_numbers<[1], [0], [0], [1], [0, 0, 1, 1], [], []>} : vector<8x32xbf16>, vector<32x64xbf16>, vector<8x64xf32> -> vector<8x64xf32>
    %5 = vector.broadcast %3 : vector<1x64xf32> to vector<8x64xf32>
    %6 = arith.addf %4, %5 : vector<8x64xf32>
    %cst_5 = arith.constant 0.000000e+00 : f32
    %7 = vector.broadcast %cst_5 : f32 to vector<8x64xf32>
    %8 = arith.cmpf oge, %6, %7 : vector<8x64xf32>
    %cst_6 = arith.constant 0.00999999977 : f32
    %9 = vector.broadcast %cst_6 : f32 to vector<8x64xf32>
    %10 = arith.mulf %9, %6 : vector<8x64xf32>
    %11 = arith.select %8, %6, %10 : vector<8x64xi1>, vector<8x64xf32>
    %12 = arith.truncf %11 : vector<8x64xf32> to vector<8x64xbf16>
    %c0_7 = arith.constant 0 : index
    %c0_8 = arith.constant 0 : index
    %13 = vector.load %arg4[%c0_7, %c0_8] : memref<64x48xbf16, #tpu.memory_space<vmem>>, vector<64x48xbf16>
    %c0_9 = arith.constant 0 : index
    %c0_10 = arith.constant 0 : index
    %14 = vector.load %arg5[%c0_9, %c0_10] : memref<1x48xf32, #tpu.memory_space<vmem>>, vector<1x48xf32>
    %cst_11 = arith.constant dense<0.000000e+00> : vector<8x48xf32>
    %15 = tpu.matmul %12, %13, %cst_11 {dimension_numbers = #tpu.dot_dimension_numbers<[1], [0], [0], [1], [0, 0, 1, 1], [], []>} : vector<8x64xbf16>, vector<64x48xbf16>, vector<8x48xf32> -> vector<8x48xf32>
    %16 = vector.broadcast %14 : vector<1x48xf32> to vector<8x48xf32>
    %17 = arith.addf %15, %16 : vector<8x48xf32>
    %cst_12 = arith.constant 0.000000e+00 : f32
    %18 = vector.broadcast %cst_12 : f32 to vector<8x48xf32>
    %19 = arith.cmpf oge, %17, %18 : vector<8x48xf32>
    %cst_13 = arith.constant 0.00999999977 : f32
    %20 = vector.broadcast %cst_13 : f32 to vector<8x48xf32>
    %21 = arith.mulf %20, %17 : vector<8x48xf32>
    %22 = arith.select %19, %17, %21 : vector<8x48xi1>, vector<8x48xf32>
    %23 = arith.truncf %22 : vector<8x48xf32> to vector<8x48xbf16>
    %c0_14 = arith.constant 0 : index
    %c0_15 = arith.constant 0 : index
    %24 = vector.load %arg6[%c0_14, %c0_15] : memref<48x10xbf16, #tpu.memory_space<vmem>>, vector<48x10xbf16>
    %c0_16 = arith.constant 0 : index
    %c0_17 = arith.constant 0 : index
    %25 = vector.load %arg7[%c0_16, %c0_17] : memref<1x10xf32, #tpu.memory_space<vmem>>, vector<1x10xf32>
    %cst_18 = arith.constant dense<0.000000e+00> : vector<8x10xf32>
    %26 = tpu.matmul %23, %24, %cst_18 {dimension_numbers = #tpu.dot_dimension_numbers<[1], [0], [0], [1], [0, 0, 1, 1], [], []>} : vector<8x48xbf16>, vector<48x10xbf16>, vector<8x10xf32> -> vector<8x10xf32>
    %27 = vector.broadcast %25 : vector<1x10xf32> to vector<8x10xf32>
    %28 = arith.addf %26, %27 : vector<8x10xf32>
    %c0_19 = arith.constant 0 : index
    %c0_20 = arith.constant 0 : index
    %29 = vector.load %arg8[%c0_19, %c0_20] : memref<8x10xf32, #tpu.memory_space<vmem>>, vector<8x10xf32>
    tpu.vector_store %arg8[%c0_19, %c0_20], %28 {strides = array<i32>} : memref<8x10xf32, #tpu.memory_space<vmem>>, vector<8x10xf32>,
    return
  }
  func.func @transform_0(%arg0: i32) -> (i32, i32) {
    %c0_i32 = arith.constant 0 : i32
    %c0_i32_0 = arith.constant 0 : i32
    return %arg0, %c0_i32 : i32, i32
  }
  func.func @transform_1(%arg0: i32) -> (i32, i32) {
    %c0_i32 = arith.constant 0 : i32
    %c0_i32_0 = arith.constant 0 : i32
    %c0_i32_1 = arith.constant 0 : i32
    return %c0_i32, %c0_i32_0 : i32, i32
  }
  func.func @transform_2(%arg0: i32) -> (i32, i32) {
    %c0_i32 = arith.constant 0 : i32
    %c0_i32_0 = arith.constant 0 : i32
    %c0_i32_1 = arith.constant 0 : i32
    return %c0_i32, %c0_i32_0 : i32, i32
  }
  func.func @transform_3(%arg0: i32) -> (i32, i32) {
    %c0_i32 = arith.constant 0 : i32
    %c0_i32_0 = arith.constant 0 : i32
    %c0_i32_1 = arith.constant 0 : i32
    return %c0_i32, %c0_i32_0 : i32, i32
  }
  func.func @transform_4(%arg0: i32) -> (i32, i32) {
    %c0_i32 = arith.constant 0 : i32
    %c0_i32_0 = arith.constant 0 : i32
    %c0_i32_1 = arith.constant 0 : i32
    return %c0_i32, %c0_i32_0 : i32, i32
  }
  func.func @transform_5(%arg0: i32) -> (i32, i32) {
    %c0_i32 = arith.constant 0 : i32
    %c0_i32_0 = arith.constant 0 : i32
    %c0_i32_1 = arith.constant 0 : i32
    return %c0_i32, %c0_i32_0 : i32, i32
  }
  func.func @transform_6(%arg0: i32) -> (i32, i32) {
    %c0_i32 = arith.constant 0 : i32
    %c0_i32_0 = arith.constant 0 : i32
    %c0_i32_1 = arith.constant 0 : i32
    return %c0_i32, %c0_i32_0 : i32, i32
  }
  func.func @transform_7(%arg0: i32) -> (i32, i32) {
    %c0_i32 = arith.constant 0 : i32
    %c0_i32_0 = arith.constant 0 : i32
    return %arg0, %c0_i32 : i32, i32
  }
}

</mosaic_0001>

<llo_original>
// kernel: tpu_custom_call.1
$region0: #{tpu_custom_call.1}
  #allocation0 [shape = 'u32[]', space=smem, size = 0x4, offset = 0x4, fixed_abs, tag = 'smem constant byte address 0x4 - core index']
  #allocation1 [shape = 'u32[144,128]{1,0:T(1,128)}', space=vmem, size = 0x12000, scoped, tag = 'internal scratch']
  %s0 = inlined_call_operand.vmem [shape: f32[8,32], index: 0, kind: input, shape index: {}]
  %s1 = inlined_call_operand.vmem [shape: bf16[32,64], index: 1, kind: input, shape index: {}]
  %s2 = inlined_call_operand.vmem [shape: f32[1,64], index: 2, kind: input, shape index: {}]
  %s3 = inlined_call_operand.vmem [shape: bf16[64,48], index: 3, kind: input, shape index: {}]
  %s4 = inlined_call_operand.vmem [shape: f32[1,48], index: 4, kind: input, shape index: {}]
  %s5 = inlined_call_operand.vmem [shape: bf16[48,10], index: 5, kind: input, shape index: {}]
  %s6 = inlined_call_operand.vmem [shape: f32[1,10], index: 6, kind: input, shape index: {}]
  %s7 = inlined_call_operand.hbm [shape: f32[8,10], index: 7, kind: output, shape index: {}]
  %s8 = sld [smem:[#allocation0]]
  $region38: #{tpu_custom_call.1} parent=0
    _
  %s10 = ssub.s32 1, %s8
  %s11 = scalar_select 0, %s10, %s8
  $region1: #{tpu_custom_call.1} parent=0
    #allocation2 [shape = 'u8[4096]{0}', space=vmem, size = 0x1000, scoped, tag = 'output window, operand 0, single buffered']
    #allocation3 [shape = 's32[1]{0}', space=sflag, size = 0x4, scoped, tag = 'scoped memory for tpu_custom_call.1']
    %12 = vsyncpa [#allocation3], 0
    // Predicated region
    $region2: #{tpu_custom_call.1} parent=1 // pred_check
      _
    $region3: #{tpu_custom_call.1} parent=1 // pred_check_branch
      %14 = sbr.rel (0) target = $region5
    $region4: #{tpu_custom_call.1} parent=1 // pred_region
      _
    $region5: #{tpu_custom_call.1} parent=1 // pred_fallthru
      _
    // Predicated region
    $region6: #{tpu_custom_call.1} parent=1 // pred_check
      _
    $region7: #{tpu_custom_call.1} parent=1 // pred_check_branch
      %16 = sbr.rel (0) target = $region9
    $region8: #{tpu_custom_call.1} parent=1 // pred_region
      _
    $region9: #{tpu_custom_call.1} parent=1 // pred_fallthru
      _
    // Predicated region
    $region10: #{tpu_custom_call.1} parent=1 // pred_check
      _
    $region11: #{tpu_custom_call.1} parent=1 // pred_check_branch
      %18 = sbr.rel (0) target = $region13
    $region12: #{tpu_custom_call.1} parent=1 // pred_region
      _
    $region13: #{tpu_custom_call.1} parent=1 // pred_fallthru
      _
    // Predicated region
    $region14: #{tpu_custom_call.1} parent=1 // pred_check
      _
    $region15: #{tpu_custom_call.1} parent=1 // pred_check_branch
      %20 = sbr.rel (0) target = $region17
    $region16: #{tpu_custom_call.1} parent=1 // pred_region
      _
    $region17: #{tpu_custom_call.1} parent=1 // pred_fallthru
      _
    // Predicated region
    $region18: #{tpu_custom_call.1} parent=1 // pred_check
      _
    $region19: #{tpu_custom_call.1} parent=1 // pred_check_branch
      %22 = sbr.rel (0) target = $region21
    $region20: #{tpu_custom_call.1} parent=1 // pred_region
      _
    $region21: #{tpu_custom_call.1} parent=1 // pred_fallthru
      _
    // Predicated region
    $region22: #{tpu_custom_call.1} parent=1 // pred_check
      _
    $region23: #{tpu_custom_call.1} parent=1 // pred_check_branch
      %24 = sbr.rel (0) target = $region25
    $region24: #{tpu_custom_call.1} parent=1 // pred_region
      _
    $region25: #{tpu_custom_call.1} parent=1 // pred_fallthru
      _
    // Predicated region
    $region26: #{tpu_custom_call.1} parent=1 // pred_check
      _
    $region27: #{tpu_custom_call.1} parent=1 // pred_check_branch
      %26 = sbr.rel (0) target = $region29
    $region28: #{tpu_custom_call.1} parent=1 // pred_region
      _
    $region29: #{tpu_custom_call.1} parent=1 // pred_fallthru
      _
    %v28 = vld [vmem:[%s0] sm:$0xff]
    %v29 = vpack.c.bf16 %v28, %v28
    %v30 = vld [vmem:[%s1] sm:$0xf]
    %v31 = vld [vmem:[%s1 + $0x4] sm:$0xf]
    %v32 = vld [vmem:[%s1 + $0x8] sm:$0xf]
    %v33 = vld [vmem:[%s1 + $0xc] sm:$0xf]
    %v34 = vld [vmem:[%s2] sm:$0x1]
    %v36 = vlaneseq
    %v37 = vshrl.u32 %v36, 7
    %v38 = vsub.s32 0, %v37
    %v39 = vrot.slane %v34, %v38
    %v45 = vunpack.c.l.b16 %v30
    %v46 = vunpack.c.l.b16 %v31
    %v47 = vunpack.c.l.b16 %v32
    %v48 = vunpack.c.l.b16 %v33
    %v49 = vpack.c.b16 %v46, %v45
    %v50 = vpack.c.b16 %v48, %v47
    %vm53 = vcmask 261120
    %v55 = vsel %vm53, %v29, 0
    %57 = vmatprep.subr.bf16.mxu0 0
    %58 = vmatpush1.bf16.msra.mxu0 %v49
    %59 = vmatprep.subr.bf16.mxu0 0
    %60 = vmatpush1.bf16.msra.mxu0 %v50
    %61 = vmatprep.subr.bf16.mxu0 0
    %62 = vmatpush1.bf16.msra.mxu0 0
    %63 = vmatprep.subr.bf16.mxu0 0
    %64 = vmatpush1.bf16.msra.mxu0 0
    %65 = vmatprep.subr.bf16.mxu0 0
    %66 = vmatpush1.bf16.msra.mxu0 0
    %67 = vmatprep.subr.bf16.mxu0 0
    %68 = vmatpush1.bf16.msra.mxu0 0
    %69 = vmatprep.subr.bf16.mxu0 0
    %70 = vmatpush1.bf16.msra.mxu0 0
    %71 = vmatprep.subr.bf16.mxu0 0
    %72 = vmatpush1.bf16.msra.mxu0 0
    %73 = vmatprep.subr.bf16.mxu0 0
    %74 = vmatpush1.bf16.msra.mxu0 0
    %75 = vmatprep.subr.bf16.mxu0 0
    %76 = vmatpush1.bf16.msra.mxu0 0
    %77 = vmatprep.subr.bf16.mxu0 0
    %78 = vmatpush1.bf16.msra.mxu0 0
    %79 = vmatprep.subr.bf16.mxu0 0
    %80 = vmatpush1.bf16.msra.mxu0 0
    %81 = vmatprep.subr.bf16.mxu0 0
    %82 = vmatpush1.bf16.msra.mxu0 0
    %83 = vmatprep.subr.bf16.mxu0 0
    %84 = vmatpush1.bf16.msra.mxu0 0
    %85 = vmatprep.subr.bf16.mxu0 0
    %86 = vmatpush1.bf16.msra.mxu0 0
    %87 = vmatprep.subr.bf16.mxu0 0
    %88 = vmatpush1.bf16.msra.mxu0 0
    %89 = vmatprep.mubr.bf16.mxu0 0
    %90 = vmatmul.mubr.bf16.gmra.mrb[0].mxu0 %v55
    %v91 = vpop.f32.mrb[0].mxu0
    %v92 = vadd.f32 %v39, %v91
    %v93 = vpop.f32.mrb[0].mxu0
    %v94 = vpop.f32.mrb[0].mxu0
    %v95 = vpop.f32.mrb[0].mxu0
    %96 = vdwg.mxu0
    %vm97 = vcmp.ge.f32.partialorder %v92, 0.0
    %v98 = vmul.f32 %v92, 0.01
    %v99 = vsel %vm97, %v92, %v98
    %v100 = vpack.c.bf16 %v99, %v99
    %v101 = vld [vmem:[%s3] sm:$0xf]
    %v102 = vld [vmem:[%s3 + $0x4] sm:$0xf]
    %v103 = vld [vmem:[%s3 + $0x8] sm:$0xf]
    %v104 = vld [vmem:[%s3 + $0xc] sm:$0xf]
    %v105 = vld [vmem:[%s3 + $0x10] sm:$0xf]
    %v106 = vld [vmem:[%s3 + $0x14] sm:$0xf]
    %v107 = vld [vmem:[%s3 + $0x18] sm:$0xf]
    %v108 = vld [vmem:[%s3 + $0x1c] sm:$0xf]
    %v109 = vld [vmem:[%s4] sm:$0x1]
    %v111 = vlaneseq
    %v112 = vshrl.u32 %v111, 7
    %v113 = vsub.s32 0, %v112
    %v114 = vrot.slane %v109, %v113
    %v124 = vunpack.c.l.b16 %v101
    %v125 = vunpack.c.l.b16 %v102
    %v126 = vunpack.c.l.b16 %v103
    %v127 = vunpack.c.l.b16 %v104
    %v128 = vunpack.c.l.b16 %v105
    %v129 = vunpack.c.l.b16 %v106
    %v130 = vunpack.c.l.b16 %v107
    %v131 = vunpack.c.l.b16 %v108
    %v132 = vpack.c.b16 %v125, %v124
    %v133 = vpack.c.b16 %v127, %v126
    %v134 = vpack.c.b16 %v129, %v128
    %v135 = vpack.c.b16 %v131, %v130
    %vm140 = vcmask 523264
    %v142 = vsel %vm140, %v100, 0
    %144 = vmatprep.subr.bf16.mxu0 0
    %145 = vmatpush1.bf16.msra.mxu0 %v132
    %146 = vmatprep.subr.bf16.mxu0 0
    %147 = vmatpush1.bf16.msra.mxu0 %v133
    %148 = vmatprep.subr.bf16.mxu0 0
    %149 = vmatpush1.bf16.msra.mxu0 %v134
    %150 = vmatprep.subr.bf16.mxu0 0
    %151 = vmatpush1.bf16.msra.mxu0 %v135
    %152 = vmatprep.subr.bf16.mxu0 0
    %153 = vmatpush1.bf16.msra.mxu0 0
    %154 = vmatprep.subr.bf16.mxu0 0
    %155 = vmatpush1.bf16.msra.mxu0 0
    %156 = vmatprep.subr.bf16.mxu0 0
    %157 = vmatpush1.bf16.msra.mxu0 0
    %158 = vmatprep.subr.bf16.mxu0 0
    %159 = vmatpush1.bf16.msra.mxu0 0
    %160 = vmatprep.subr.bf16.mxu0 0
    %161 = vmatpush1.bf16.msra.mxu0 0
    %162 = vmatprep.subr.bf16.mxu0 0
    %163 = vmatpush1.bf16.msra.mxu0 0
    %164 = vmatprep.subr.bf16.mxu0 0
    %165 = vmatpush1.bf16.msra.mxu0 0
    %166 = vmatprep.subr.bf16.mxu0 0
    %167 = vmatpush1.bf16.msra.mxu0 0
    %168 = vmatprep.subr.bf16.mxu0 0
    %169 = vmatpush1.bf16.msra.mxu0 0
    %170 = vmatprep.subr.bf16.mxu0 0
    %171 = vmatpush1.bf16.msra.mxu0 0
    %172 = vmatprep.subr.bf16.mxu0 0
    %173 = vmatpush1.bf16.msra.mxu0 0
    %174 = vmatprep.subr.bf16.mxu0 0
    %175 = vmatpush1.bf16.msra.mxu0 0
    %176 = vmatprep.mubr.bf16.mxu0 0
    %177 = vmatmul.mubr.bf16.gmra.mrb[0].mxu0 %v142
    %v178 = vpop.f32.mrb[0].mxu0
    %v179 = vadd.f32 %v114, %v178
    %v180 = vpop.f32.mrb[0].mxu0
    %v181 = vpop.f32.mrb[0].mxu0
    %v182 = vpop.f32.mrb[0].mxu0
    %183 = vdwg.mxu0
    %vm184 = vcmp.ge.f32.partialorder %v179, 0.0
    %v185 = vmul.f32 %v179, 0.01
    %v186 = vsel %vm184, %v179, %v185
    %v187 = vpack.c.bf16 %v186, %v186
    %v188 = vld [vmem:[%s5] sm:$0xf]
    %v189 = vld [vmem:[%s5 + $0x4] sm:$0xf]
    %v190 = vld [vmem:[%s5 + $0x8] sm:$0xf]
    %v191 = vld [vmem:[%s5 + $0xc] sm:$0xf]
    %v192 = vld [vmem:[%s5 + $0x10] sm:$0xf]
    %v193 = vld [vmem:[%s5 + $0x14] sm:$0xf]
    %v194 = vld [vmem:[%s6] sm:$0x1]
    %v196 = vlaneseq
    %v197 = vshrl.u32 %v196, 7
    %v198 = vsub.s32 0, %v197
    %v199 = vrot.slane %v194, %v198
    %v207 = vunpack.c.l.b16 %v188
    %v208 = vunpack.c.l.b16 %v189
    %v209 = vunpack.c.l.b16 %v190
    %v210 = vunpack.c.l.b16 %v191
    %v211 = vunpack.c.l.b16 %v192
    %v212 = vunpack.c.l.b16 %v193
    %v213 = vpack.c.b16 %v208, %v207
    %v214 = vpack.c.b16 %v210, %v209
    %v215 = vpack.c.b16 %v212, %v211
    %vm219 = vcmask 392192
    %v221 = vsel %vm219, %v187, 0
    %223 = vmatprep.subr.bf16.mxu0 0
    %224 = vmatpush1.bf16.msra.mxu0 %v213
    %225 = vmatprep.subr.bf16.mxu0 0
    %226 = vmatpush1.bf16.msra.mxu0 %v214
    %227 = vmatprep.subr.bf16.mxu0 0
    %228 = vmatpush1.bf16.msra.mxu0 %v215
    %229 = vmatprep.subr.bf16.mxu0 0
    %230 = vmatpush1.bf16.msra.mxu0 0
    %231 = vmatprep.subr.bf16.mxu0 0
    %232 = vmatpush1.bf16.msra.mxu0 0
    %233 = vmatprep.subr.bf16.mxu0 0
    %234 = vmatpush1.bf16.msra.mxu0 0
    %235 = vmatprep.subr.bf16.mxu0 0
    %236 = vmatpush1.bf16.msra.mxu0 0
    %237 = vmatprep.subr.bf16.mxu0 0
    %238 = vmatpush1.bf16.msra.mxu0 0
    %239 = vmatprep.subr.bf16.mxu0 0
    %240 = vmatpush1.bf16.msra.mxu0 0
    %241 = vmatprep.subr.bf16.mxu0 0
    %242 = vmatpush1.bf16.msra.mxu0 0
    %243 = vmatprep.subr.bf16.mxu0 0
    %244 = vmatpush1.bf16.msra.mxu0 0
    %245 = vmatprep.subr.bf16.mxu0 0
    %246 = vmatpush1.bf16.msra.mxu0 0
    %247 = vmatprep.subr.bf16.mxu0 0
    %248 = vmatpush1.bf16.msra.mxu0 0
    %249 = vmatprep.subr.bf16.mxu0 0
    %250 = vmatpush1.bf16.msra.mxu0 0
    %251 = vmatprep.subr.bf16.mxu0 0
    %252 = vmatpush1.bf16.msra.mxu0 0
    %253 = vmatprep.subr.bf16.mxu0 0
    %254 = vmatpush1.bf16.msra.mxu0 0
    %255 = vmatprep.mubr.bf16.mxu0 0
    %256 = vmatmul.mubr.bf16.gmra.mrb[0].mxu0 %v221
    %v257 = vpop.f32.mrb[0].mxu0
    %v258 = vadd.f32 %v199, %v257
    %v259 = vpop.f32.mrb[0].mxu0
    %v260 = vpop.f32.mrb[0].mxu0
    %v261 = vpop.f32.mrb[0].mxu0
    %262 = vdwg.mxu0
    %vm263 = vcmask 80896
    %264 = vst.msk [vmem:[#allocation2] sm:$0xff] %vm263, %v258
    // Predicated region
    $region30: #{tpu_custom_call.1} parent=1 // pred_check
      _
    $region31: #{tpu_custom_call.1} parent=1 // pred_check_branch
      %266 = sbr.rel (0) target = $region33
    $region32: #{tpu_custom_call.1} parent=1 // pred_region
      %s268 = ssub.s32 128, 128
      %269 = vsyncadd [#allocation3], %s268
      %s271 = sshll.u32 [#allocation2], 4
      %s272 = int_to_ptr.vmem [resolvable:$true] %s271
      %274 = dma.vmem_to_hbm [thread:$0]  %s272, 128, %s7, [#allocation3]
    $region33: #{tpu_custom_call.1} parent=1 // pred_fallthru
      _
    // Predicated region
    $region34: #{tpu_custom_call.1} parent=1 // pred_check
      _
    $region35: #{tpu_custom_call.1} parent=1 // pred_check_branch
      %276 = sbr.rel (0) target = $region37
    $region36: #{tpu_custom_call.1} parent=1 // pred_region
      %277 = dma.done [#allocation3], 128
    $region37: #{tpu_custom_call.1} parent=1 // pred_fallthru
      _
    %278 = vsyncpa [#allocation3], 1

</llo_original>
